<compile_context>
chip_gen: v6e
topology: v6e:2x2x1
jax: 0.10.0
libtpu: 0.0.40
codegen_flags: <defaults>
</compile_context>

<pallas_src>
import functools

import jax
import jax.numpy as jnp
from jax.experimental import pallas as pl
from jax.experimental.pallas import tpu as pltpu


def _round_up(a: int, b: int) -> int:
    return pl.cdiv(a, b) * b


def _mlp_kernel(num_classes, x_ref, w1_ref, b1_ref, w2_ref, b2_ref, o_ref):
    # fc1 + ReLU: bf16 MXU inputs, f32 accumulate, f32 elementwise.
    h = jnp.dot(x_ref[...], w1_ref[...], preferred_element_type=jnp.float32)
    h = jnp.maximum(h + b1_ref[...], 0.0)

    # fc2: cast the ReLU'd activations back to bf16 for the MXU, accumulate f32.
    logits = jnp.dot(h.astype(jnp.bfloat16), w2_ref[...],
                     preferred_element_type=jnp.float32) + b2_ref[...]

    # Mask padded class lanes so they contribute exactly 0 to the softmax.
    lane = jax.lax.broadcasted_iota(jnp.int32, logits.shape, dimension=1)
    logits = jnp.where(lane < num_classes, logits, jnp.float32(-1e30))

    # Numerically stable softmax along the class axis (f32).
    m = jnp.max(logits, axis=-1, keepdims=True)
    e = jnp.exp(logits - m)
    denom = jnp.sum(e, axis=-1, keepdims=True)
    o_ref[...] = (e * pl.reciprocal(denom, approx=True)).astype(o_ref.dtype)


def mlp_forward(x, w1, b1, w2, b2, *, tm=512):
    """Forward pass matching torch MLP.

    x : (B, D_in) float32
    w1: (H, D_in), b1: (H,)    -- PyTorch nn.Linear layout (out_features, in_features)
    w2: (C, H),    b2: (C,)
    Returns (B, C) float32 softmax probabilities.
    """
    B, D = x.shape
    H = w1.shape[0]
    C = w2.shape[0]
    assert w1.shape == (H, D) and b1.shape == (H,)
    assert w2.shape == (C, H) and b2.shape == (C,)

    # Pad hidden/class dims to lane width; pick a batch tile (multiple of 16 for bf16).
    H_pad = _round_up(H, 128)
    C_pad = _round_up(C, 128)
    tm = max(16, min(_round_up(tm, 16), _round_up(B, 16)))
    B_pad = _round_up(B, tm)
    grid = (B_pad // tm,)

    # bf16 matmul operands (halves HBM bytes); zero-padding the contraction dims is exact.
    x_p = jnp.zeros((B_pad, D), jnp.bfloat16).at[:B, :].set(x.astype(jnp.bfloat16))
    w1_p = jnp.zeros((D, H_pad), jnp.bfloat16).at[:, :H].set(
        w1.T.astype(jnp.bfloat16))
    w2_p = jnp.zeros((H_pad, C_pad), jnp.bfloat16).at[:H, :C].set(
        w2.T.astype(jnp.bfloat16))
    # Biases stay f32 (added to f32 accumulators).
    b1_p = jnp.zeros((1, H_pad), jnp.float32).at[0, :H].set(b1.astype(jnp.float32))
    b2_p = jnp.zeros((1, C_pad), jnp.float32).at[0, :C].set(b2.astype(jnp.float32))

    # Explicit VMEM budget: double-buffered x/out tiles + resident weights + live f32
    # intermediates, with headroom; capped at the 32 MiB scoped default so it is safe
    # on every chip (incl. v7x's 64 MiB physical VMEM).
    need = (2 * tm * D * 2            # x tiles (bf16, double-buffered)
            + 2 * D * H_pad * 2       # w1
            + 2 * H_pad * 4           # b1
            + 2 * H_pad * C_pad * 2   # w2
            + 2 * C_pad * 4           # b2
            + 2 * tm * C_pad * 4      # out tiles (f32, double-buffered)
            + tm * H_pad * 4 + 2 * tm * C_pad * 4)  # h / logits / exp live values
    vmem_limit = int(min(32 * 1024 * 1024, max(4 * need, 4 * 1024 * 1024)))

    out = pl.pallas_call(
        functools.partial(_mlp_kernel, C),
        out_shape=jax.ShapeDtypeStruct((B_pad, C_pad), jnp.float32),
        grid_spec=pltpu.PrefetchScalarGridSpec(
            num_scalar_prefetch=0,
            grid=grid,
            in_specs=[
                pl.BlockSpec((tm, D), lambda i: (i, 0)),        # x: streamed per tile
                pl.BlockSpec((D, H_pad), lambda i: (0, 0)),     # w1: VMEM-resident
                pl.BlockSpec((1, H_pad), lambda i: (0, 0)),     # b1: VMEM-resident
                pl.BlockSpec((H_pad, C_pad), lambda i: (0, 0)), # w2: VMEM-resident
                pl.BlockSpec((1, C_pad), lambda i: (0, 0)),     # b2: VMEM-resident
            ],
            out_specs=pl.BlockSpec((tm, C_pad), lambda i: (i, 0)),
        ),
        compiler_params=pltpu.CompilerParams(
            dimension_semantics=("parallel",),
            vmem_limit_bytes=vmem_limit,
        ),
    )(x_p, w1_p, b1_p, w2_p, b2_p)

    return out[:B, :C]


def reference_mlp(x, w1, b1, w2, b2):
    h = jnp.maximum(x @ w1.T + b1, 0.0)
    logits = h @ w2.T + b2
    return jax.nn.softmax(logits, axis=1)


if __name__ == "__main__":
    # Small shapes consistent with the module's (batch, input_dim) forward.
    batch, input_dim, hidden_dim, output_dim = 64, 256, 64, 10

    key = jax.random.PRNGKey(0)
    kx, kw1, kb1, kw2, kb2 = jax.random.split(key, 5)

    x = jax.random.normal(kx, (batch, input_dim), dtype=jnp.float32)
    # PyTorch nn.Linear layout: weight (out_features, in_features), bias (out_features,)
    w1 = jax.random.normal(kw1, (hidden_dim, input_dim), dtype=jnp.float32) * 0.05
    b1 = jax.random.normal(kb1, (hidden_dim,), dtype=jnp.float32) * 0.05
    w2 = jax.random.normal(kw2, (output_dim, hidden_dim), dtype=jnp.float32) * 0.05
    b2 = jax.random.normal(kb2, (output_dim,), dtype=jnp.float32) * 0.05

    # tm=32 exercises a multi-step batch grid even at these toy sizes.
    out = mlp_forward(x, w1, b1, w2, b2, tm=32)
    out = jax.block_until_ready(out)

    ref = reference_mlp(x, w1, b1, w2, b2)
    assert out.shape == (batch, output_dim)
    # bf16 matmul inputs + approx reciprocal -> relaxed tolerances vs the f32 reference.
    assert jnp.allclose(out, ref, atol=2e-2, rtol=2e-2)
    assert jnp.allclose(jnp.sum(out, axis=1), 1.0, atol=5e-3)

    print("KERNEL_OK")
</pallas_src>

<mosaic_0001>
module attributes {stable_mosaic.version = 11 : i64} {
  func.func @_mlp_kernel(%arg0: i32, %arg1: memref<32x256xbf16, #tpu.memory_space<vmem>>, %arg2: memref<256x128xbf16, #tpu.memory_space<vmem>>, %arg3: memref<1x128xf32, #tpu.memory_space<vmem>>, %arg4: memref<128x128xbf16, #tpu.memory_space<vmem>>, %arg5: memref<1x128xf32, #tpu.memory_space<vmem>>, %arg6: memref<32x128xf32, #tpu.memory_space<vmem>>) attributes {dimension_semantics = [#tpu.dimension_semantics<parallel>], iteration_bounds = array<i64: 2>, scalar_prefetch = 0 : i64, scratch_operands = 0 : i64, tpu.core_type = #tpu.core_type<tc>, window_params = [{transform_indices = @transform_0, window_bounds = array<i64: 32, 256>}, {pipeline_mode = #tpu.pipeline_mode<synchronous>, transform_indices = @transform_1, window_bounds = array<i64: 256, 128>}, {pipeline_mode = #tpu.pipeline_mode<synchronous>, transform_indices = @transform_2, window_bounds = array<i64: 1, 128>}, {pipeline_mode = #tpu.pipeline_mode<synchronous>, transform_indices = @transform_3, window_bounds = array<i64: 128, 128>}, {pipeline_mode = #tpu.pipeline_mode<synchronous>, transform_indices = @transform_4, window_bounds = array<i64: 1, 128>}, {transform_indices = @transform_5, window_bounds = array<i64: 32, 128>}]} {
    %c0 = arith.constant 0 : index
    %c0_0 = arith.constant 0 : index
    %0 = vector.load %arg1[%c0, %c0_0] : memref<32x256xbf16, #tpu.memory_space<vmem>>, vector<32x256xbf16>
    %c0_1 = arith.constant 0 : index
    %c0_2 = arith.constant 0 : index
    %1 = vector.load %arg2[%c0_1, %c0_2] : memref<256x128xbf16, #tpu.memory_space<vmem>>, vector<256x128xbf16>
    %cst = arith.constant dense<0.000000e+00> : vector<32x128xf32>
    %2 = tpu.matmul %0, %1, %cst {dimension_numbers = #tpu.dot_dimension_numbers<[1], [0], [0], [1], [0, 0, 1, 1], [], []>} : vector<32x256xbf16>, vector<256x128xbf16>, vector<32x128xf32> -> vector<32x128xf32>
    %c0_3 = arith.constant 0 : index
    %c0_4 = arith.constant 0 : index
    %3 = vector.load %arg3[%c0_3, %c0_4] : memref<1x128xf32, #tpu.memory_space<vmem>>, vector<1x128xf32>
    %4 = vector.broadcast %3 : vector<1x128xf32> to vector<32x128xf32>
    %5 = arith.addf %2, %4 : vector<32x128xf32>
    %cst_5 = arith.constant 0.000000e+00 : f32
    %6 = vector.broadcast %cst_5 : f32 to vector<32x128xf32>
    %7 = arith.maximumf %5, %6 : vector<32x128xf32>
    %8 = arith.truncf %7 : vector<32x128xf32> to vector<32x128xbf16>
    %c0_6 = arith.constant 0 : index
    %c0_7 = arith.constant 0 : index
    %9 = vector.load %arg4[%c0_6, %c0_7] : memref<128x128xbf16, #tpu.memory_space<vmem>>, vector<128x128xbf16>
    %cst_8 = arith.constant dense<0.000000e+00> : vector<32x128xf32>
    %10 = tpu.matmul %8, %9, %cst_8 {dimension_numbers = #tpu.dot_dimension_numbers<[1], [0], [0], [1], [0, 0, 1, 1], [], []>} : vector<32x128xbf16>, vector<128x128xbf16>, vector<32x128xf32> -> vector<32x128xf32>
    %c0_9 = arith.constant 0 : index
    %c0_10 = arith.constant 0 : index
    %11 = vector.load %arg5[%c0_9, %c0_10] : memref<1x128xf32, #tpu.memory_space<vmem>>, vector<1x128xf32>
    %12 = vector.broadcast %11 : vector<1x128xf32> to vector<32x128xf32>
    %13 = arith.addf %10, %12 : vector<32x128xf32>
    %14 = tpu.iota {dimensions = array<i32: 1>} : vector<32x128xi32>
    %c10_i32 = arith.constant 10 : i32
    %15 = vector.broadcast %c10_i32 : i32 to vector<32x128xi32>
    %16 = arith.cmpi slt, %14, %15 : vector<32x128xi32>
    %cst_11 = arith.constant -1.000000e+30 : f32
    %17 = vector.broadcast %cst_11 : f32 to vector<32x128xf32>
    %18 = arith.select %16, %13, %17 : vector<32x128xi1>, vector<32x128xf32>
    %cst_12 = arith.constant dense<0xFF800000> : vector<32xf32>
    %19 = vector.multi_reduction <maximumf>, %18, %cst_12 [1] : vector<32x128xf32> to vector<32xf32>
    %20 = vector.shape_cast %19 : vector<32xf32> to vector<32x1xf32>
    %21 = vector.broadcast %20 : vector<32x1xf32> to vector<32x128xf32>
    %22 = arith.subf %18, %21 : vector<32x128xf32>
    %23 = math.exp %22 : vector<32x128xf32>
    %cst_13 = arith.constant dense<0.000000e+00> : vector<32xf32>
    %24 = vector.multi_reduction <add>, %23, %cst_13 [1] : vector<32x128xf32> to vector<32xf32>
    %25 = vector.shape_cast %24 : vector<32xf32> to vector<32x1xf32>
    %26 = tpu.reciprocal %25 {approx = true} : vector<32x1xf32> -> vector<32x1xf32>
    %27 = vector.broadcast %26 : vector<32x1xf32> to vector<32x128xf32>
    %28 = arith.mulf %23, %27 : vector<32x128xf32>
    %c0_14 = arith.constant 0 : index
    %c0_15 = arith.constant 0 : index
    %29 = vector.load %arg6[%c0_14, %c0_15] : memref<32x128xf32, #tpu.memory_space<vmem>>, vector<32x128xf32>
    tpu.vector_store %arg6[%c0_14, %c0_15], %28 {strides = array<i32>} : memref<32x128xf32, #tpu.memory_space<vmem>>, vector<32x128xf32>,
    return
  }
  func.func @transform_0(%arg0: i32) -> (i32, i32) {
    %c0_i32 = arith.constant 0 : i32
    %c0_i32_0 = arith.constant 0 : i32
    return %arg0, %c0_i32 : i32, i32
  }
  func.func @transform_1(%arg0: i32) -> (i32, i32) {
    %c0_i32 = arith.constant 0 : i32
    %c0_i32_0 = arith.constant 0 : i32
    %c0_i32_1 = arith.constant 0 : i32
    return %c0_i32, %c0_i32_0 : i32, i32
  }
  func.func @transform_2(%arg0: i32) -> (i32, i32) {
    %c0_i32 = arith.constant 0 : i32
    %c0_i32_0 = arith.constant 0 : i32
    %c0_i32_1 = arith.constant 0 : i32
    return %c0_i32, %c0_i32_0 : i32, i32
  }
  func.func @transform_3(%arg0: i32) -> (i32, i32) {
    %c0_i32 = arith.constant 0 : i32
    %c0_i32_0 = arith.constant 0 : i32
    %c0_i32_1 = arith.constant 0 : i32
    return %c0_i32, %c0_i32_0 : i32, i32
  }
  func.func @transform_4(%arg0: i32) -> (i32, i32) {
    %c0_i32 = arith.constant 0 : i32
    %c0_i32_0 = arith.constant 0 : i32
    %c0_i32_1 = arith.constant 0 : i32
    return %c0_i32, %c0_i32_0 : i32, i32
  }
  func.func @transform_5(%arg0: i32) -> (i32, i32) {
    %c0_i32 = arith.constant 0 : i32
    %c0_i32_0 = arith.constant 0 : i32
    return %arg0, %c0_i32 : i32, i32
  }
}

</mosaic_0001>

<llo_original>
// kernel: tpu_custom_call.1
$region0: #{tpu_custom_call.1}
  #allocation0 [shape = 'u32[]', space=smem, size = 0x4, offset = 0x4, fixed_abs, tag = 'smem constant byte address 0x4 - core index']
  #allocation1 [shape = 'u32[144,128]{1,0:T(1,128)}', space=vmem, size = 0x12000, scoped, tag = 'internal scratch']
  %s0 = inlined_call_operand.hbm [shape: bf16[64,256], index: 0, kind: input, shape index: {}]
  %s1 = inlined_call_operand.hbm [shape: bf16[256,128], index: 1, kind: input, shape index: {}]
  %s2 = inlined_call_operand.vmem [shape: f32[1,128], index: 2, kind: input, shape index: {}]
  %s3 = inlined_call_operand.hbm [shape: bf16[128,128], index: 3, kind: input, shape index: {}]
  %s4 = inlined_call_operand.vmem [shape: f32[1,128], index: 4, kind: input, shape index: {}]
  %s5 = inlined_call_operand.hbm [shape: f32[64,128], index: 5, kind: output, shape index: {}]
  %s6 = sld [smem:[#allocation0]]
  $region65: #{tpu_custom_call.1} parent=0
    _
  %s8 = ssub.s32 1, %s6
  %s9 = scalar_select 0, %s8, %s6
  $region1: #{tpu_custom_call.1} parent=0
    #allocation2 [shape = 'u8[32768]{0}', space=vmem, size = 0x8000, scoped, tag = 'input window, operand 0']
    #allocation3 [shape = 's32[2]{0}', space=sflag, size = 0x8, scoped, tag = 'scoped memory for tpu_custom_call.1']
    #allocation4 [shape = 's32[2]{0}', space=sflag, size = 0x8, scoped, tag = 'scoped memory for tpu_custom_call.1']
    #allocation5 [shape = 'u8[65536]{0}', space=vmem, size = 0x10000, scoped, tag = 'input window, operand 1, single buffered']
    #allocation6 [shape = 's32[1]{0}', space=sflag, size = 0x4, scoped, tag = 'scoped memory for tpu_custom_call.1']
    #allocation7 [shape = 'u8[32768]{0}', space=vmem, size = 0x8000, scoped, tag = 'input window, operand 3, single buffered']
    #allocation8 [shape = 'u8[32768]{0}', space=vmem, size = 0x8000, scoped, tag = 'output window, operand 0']
    %10 = vsyncpa [#allocation3], 0
    %s11 = scalar_lea.sflag [#allocation3], 1
    %12 = vsyncpa %s11, 0
    %13 = vsyncpa [#allocation6], 0
    %14 = vsyncpa [#allocation4], 0
    %s15 = scalar_lea.sflag [#allocation4], 1
    %16 = vsyncpa %s15, 0
    loop: start=0, step=1, limit=4
    $region2: #{tpu_custom_call.1} parent=1 // loop_pre_header
      _
    $region3: #{tpu_custom_call.1} parent=1 // loop_header
      %s18 = sphi 0, %s22
      %p19 = scmp.ge.s32.totalorder %s18, 4
      %s28 = sphi 0, %s30
      %s31 = sphi 0, %s28
      %s32 = sphi 0, %s31
      %s48 = sphi 0, %s32
      %s52 = sphi 0, %s52
      %s54 = sphi 0, %s52
      %s55 = sphi 0, %s54
      %s69 = sphi 0, %s55
      %s73 = sphi 0, %s73
      %s75 = sphi 0, %s73
      %s76 = sphi 0, %s75
      %s90 = sphi 0, %s76
      %s94 = sphi 0, %s94
      %s96 = sphi 0, %s94
      %s97 = sphi 0, %s96
      %s111 = sphi 0, %s97
      %s115 = sphi 0, %s115
      %s117 = sphi 0, %s115
      %s118 = sphi 0, %s117
      %s132 = sphi 0, %s118
      %s138 = sphi 0, %s140
      %s141 = sphi 0, %s138
      %s142 = sphi 0, %s141
      %s158 = sphi 0, %s142
    $region4: #{tpu_custom_call.1} parent=1 // loop_header_branch
      %21 = sbr.rel (%p19) target = $region8
    $region5: #{tpu_custom_call.1} parent=1 // loop_body
      %s23 = ssub.s32 %s18, 1
      %s24 = ssub.s32 %s18, 2
      %s25 = sadd.s32 %s18, 1
      %s26 = ssub.s32 %s18, %s25
      %p27 = scmp.eq.s32.totalorder %s26, 0
      %s29 = sadd.s32 %s28, 1
      %s30 = scalar_select %p27, %s28, %s29
      %p33 = pneg %p27
      %p34 = scmp.eq.s32.totalorder %s18, 1
      %p35 = por %p33, %p34
      %p36 = scmp.ne.s32.totalorder %s28, %s31
      %p37 = scmp.eq.s32.totalorder %s18, 0
      %p38 = por %p36, %p37
      %p39 = scmp.ne.s32.totalorder %s28, %s31
      %p40 = scmp.eq.s32.totalorder %s23, 1
      %p41 = por %p39, %p40
      %p42 = scmp.ne.s32.totalorder %s31, %s32
      %p43 = scmp.eq.s32.totalorder %s23, 0
      %p44 = por %p42, %p43
      %p45 = scmp.ne.s32.totalorder %s31, %s32
      %p46 = scmp.eq.s32.totalorder %s24, 1
      %p47 = por %p45, %p46
      %p49 = scmp.ne.s32.totalorder %s32, %s48
      %p50 = scmp.eq.s32.totalorder %s24, 0
      %p51 = por %p49, %p50
      %s53 = sadd.s32 %s52, 1
      %p56 = scmp.eq.s32.totalorder %s18, 1
      %p57 = scmp.ne.s32.totalorder %s52, %s54
      %p58 = scmp.eq.s32.totalorder %s18, 0
      %p59 = por %p57, %p58
      %p60 = scmp.ne.s32.totalorder %s52, %s54
      %p61 = scmp.eq.s32.totalorder %s23, 1
      %p62 = por %p60, %p61
      %p63 = scmp.ne.s32.totalorder %s54, %s55
      %p64 = scmp.eq.s32.totalorder %s23, 0
      %p65 = por %p63, %p64
      %p66 = scmp.ne.s32.totalorder %s54, %s55
      %p67 = scmp.eq.s32.totalorder %s24, 1
      %p68 = por %p66, %p67
      %p70 = scmp.ne.s32.totalorder %s55, %s69
      %p71 = scmp.eq.s32.totalorder %s24, 0
      %p72 = por %p70, %p71
      %s74 = sadd.s32 %s73, 1
      %p77 = scmp.eq.s32.totalorder %s18, 1
      %p78 = scmp.ne.s32.totalorder %s73, %s75
      %p79 = scmp.eq.s32.totalorder %s18, 0
      %p80 = por %p78, %p79
      %p81 = scmp.ne.s32.totalorder %s73, %s75
      %p82 = scmp.eq.s32.totalorder %s23, 1
      %p83 = por %p81, %p82
      %p84 = scmp.ne.s32.totalorder %s75, %s76
      %p85 = scmp.eq.s32.totalorder %s23, 0
      %p86 = por %p84, %p85
      %p87 = scmp.ne.s32.totalorder %s75, %s76
      %p88 = scmp.eq.s32.totalorder %s24, 1
      %p89 = por %p87, %p88
      %p91 = scmp.ne.s32.totalorder %s76, %s90
      %p92 = scmp.eq.s32.totalorder %s24, 0
      %p93 = por %p91, %p92
      %s95 = sadd.s32 %s94, 1
      %p98 = scmp.eq.s32.totalorder %s18, 1
      %p99 = scmp.ne.s32.totalorder %s94, %s96
      %p100 = scmp.eq.s32.totalorder %s18, 0
      %p101 = por %p99, %p100
      %p102 = scmp.ne.s32.totalorder %s94, %s96
      %p103 = scmp.eq.s32.totalorder %s23, 1
      %p104 = por %p102, %p103
      %p105 = scmp.ne.s32.totalorder %s96, %s97
      %p106 = scmp.eq.s32.totalorder %s23, 0
      %p107 = por %p105, %p106
      %p108 = scmp.ne.s32.totalorder %s96, %s97
      %p109 = scmp.eq.s32.totalorder %s24, 1
      %p110 = por %p108, %p109
      %p112 = scmp.ne.s32.totalorder %s97, %s111
      %p113 = scmp.eq.s32.totalorder %s24, 0
      %p114 = por %p112, %p113
      %s116 = sadd.s32 %s115, 1
      %p119 = scmp.eq.s32.totalorder %s18, 1
      %p120 = scmp.ne.s32.totalorder %s115, %s117
      %p121 = scmp.eq.s32.totalorder %s18, 0
      %p122 = por %p120, %p121
      %p123 = scmp.ne.s32.totalorder %s115, %s117
      %p124 = scmp.eq.s32.totalorder %s23, 1
      %p125 = por %p123, %p124
      %p126 = scmp.ne.s32.totalorder %s117, %s118
      %p127 = scmp.eq.s32.totalorder %s23, 0
      %p128 = por %p126, %p127
      %p129 = scmp.ne.s32.totalorder %s117, %s118
      %p130 = scmp.eq.s32.totalorder %s24, 1
      %p131 = por %p129, %p130
      %p133 = scmp.ne.s32.totalorder %s118, %s132
      %p134 = scmp.eq.s32.totalorder %s24, 0
      %p135 = por %p133, %p134
      %s136 = ssub.s32 %s18, %s25
      %p137 = scmp.eq.s32.totalorder %s136, 0
      %s139 = sadd.s32 %s138, 1
      %s140 = scalar_select %p137, %s138, %s139
      %p143 = pneg %p137
      %p144 = scmp.eq.s32.totalorder %s18, 1
      %p145 = por %p143, %p144
      %p146 = scmp.ne.s32.totalorder %s138, %s141
      %p147 = scmp.eq.s32.totalorder %s18, 0
      %p148 = por %p146, %p147
      %p149 = scmp.ne.s32.totalorder %s138, %s141
      %p150 = scmp.eq.s32.totalorder %s23, 1
      %p151 = por %p149, %p150
      %p152 = scmp.ne.s32.totalorder %s141, %s142
      %p153 = scmp.eq.s32.totalorder %s23, 0
      %p154 = por %p152, %p153
      %p155 = scmp.ne.s32.totalorder %s141, %s142
      %p156 = scmp.eq.s32.totalorder %s24, 1
      %p157 = por %p155, %p156
      %p159 = scmp.ne.s32.totalorder %s142, %s158
      %p160 = scmp.eq.s32.totalorder %s24, 0
      %p161 = por %p159, %p160
      %p162 = scmp.le.s32.totalorder 1, %s18
      %p163 = scmp.lt.s32.totalorder %s18, 3
      %p164 = pnand %p162, %p163
      %p165 = pneg %p164
      // Predicated region
      $region9: #{tpu_custom_call.1} parent=5 // pred_check
        _
      $region10: #{tpu_custom_call.1} parent=5 // pred_check_branch
        %167 = sbr.rel (%p164) target = $region12
      $region11: #{tpu_custom_call.1} parent=5 // pred_region
        %s168 = ssub.s32 %s18, 1
        // Predicated region
        $region13: #{tpu_custom_call.1} parent=11 // pred_check
          %p169 = pneg %p65
        $region14: #{tpu_custom_call.1} parent=11 // pred_check_branch
          %171 = sbr.rel (%p169) target = $region16
        $region15: #{tpu_custom_call.1} parent=11 // pred_region
          %s173 = ssub.s32 2048, 2048
          %174 = vsyncadd [#allocation6], %s173
          %s175 = sshll.u32 [#allocation5], 4
          %s176 = int_to_ptr.vmem [resolvable:$true] %s175
          %181 = dma.hbm_to_vmem [thread:$0]  %s1, 2048, %s176, [#allocation6], 64, 64, 4
        $region16: #{tpu_custom_call.1} parent=11 // pred_fallthru
          _
        // Predicated region
        $region17: #{tpu_custom_call.1} parent=11 // pred_check
          %p182 = pneg %p86
        $region18: #{tpu_custom_call.1} parent=11 // pred_check_branch
          %184 = sbr.rel (%p182) target = $region20
        $region19: #{tpu_custom_call.1} parent=11 // pred_region
          _
        $region20: #{tpu_custom_call.1} parent=11 // pred_fallthru
          _
        // Predicated region
        $region21: #{tpu_custom_call.1} parent=11 // pred_check
          %p185 = pneg %p107
        $region22: #{tpu_custom_call.1} parent=11 // pred_check_branch
          %187 = sbr.rel (%p185) target = $region24
        $region23: #{tpu_custom_call.1} parent=11 // pred_region
          %s189 = ssub.s32 1024, 1024
          %190 = vsyncadd [#allocation6], %s189
          %s191 = sshll.u32 [#allocation7], 4
          %s192 = int_to_ptr.vmem [resolvable:$true] %s191
          %197 = dma.hbm_to_vmem [thread:$0]  %s3, 1024, %s192, [#allocation6], 64, 64, 4
        $region24: #{tpu_custom_call.1} parent=11 // pred_fallthru
          _
        // Predicated region
        $region25: #{tpu_custom_call.1} parent=11 // pred_check
          %p198 = pneg %p128
        $region26: #{tpu_custom_call.1} parent=11 // pred_check_branch
          %200 = sbr.rel (%p198) target = $region28
        $region27: #{tpu_custom_call.1} parent=11 // pred_region
          _
        $region28: #{tpu_custom_call.1} parent=11 // pred_fallthru
          _
      $region12: #{tpu_custom_call.1} parent=5 // pred_fallthru
        _
      %p201 = scmp.lt.s32.totalorder %s18, 2
      // Predicated region
      $region29: #{tpu_custom_call.1} parent=5 // pred_check
        %p202 = pneg %p201
      $region30: #{tpu_custom_call.1} parent=5 // pred_check_branch
        %204 = sbr.rel (%p202) target = $region32
      $region31: #{tpu_custom_call.1} parent=5 // pred_region
        // Predicated region
        $region33: #{tpu_custom_call.1} parent=31 // pred_check
          %p205 = pneg %p38
        $region34: #{tpu_custom_call.1} parent=31 // pred_check_branch
          %207 = sbr.rel (%p205) target = $region36
        $region35: #{tpu_custom_call.1} parent=31 // pred_region
          %s208 = sand.u32 %s28, 1
          %s209 = scalar_lea.sflag [#allocation3], %s208
          %s210 = sand.u32 %s28, 1
          %s211 = smul.addr %s210, 32
          %s212 = scalar_lea.vmem [#allocation2], %s211
          %s213 = smul.u32 4, %s18
          %s215 = ssub.s32 512, 512
          %216 = vsyncadd %s209, %s215
          %s217 = smul.addr %s213, 2
          %s218 = smul.addr %s217, 64
          %s219 = scalar_lea.hbm %s0, %s218
          %s220 = sshll.u32 %s212, 4
          %s221 = int_to_ptr.vmem [resolvable:$true] %s220
          %226 = dma.hbm_to_vmem [thread:$0]  %s219, 512, %s221, %s209, 128, 128, 8
        $region36: #{tpu_custom_call.1} parent=31 // pred_fallthru
          _
      $region32: #{tpu_custom_call.1} parent=5 // pred_fallthru
        _
      %p227 = scmp.le.s32.totalorder 1, %s18
      %p228 = scmp.lt.s32.totalorder %s18, 3
      %p229 = pnand %p227, %p228
      %p230 = pneg %p229
      // Predicated region
      $region37: #{tpu_custom_call.1} parent=5 // pred_check
        _
      $region38: #{tpu_custom_call.1} parent=5 // pred_check_branch
        %232 = sbr.rel (%p229) target = $region40
      $region39: #{tpu_custom_call.1} parent=5 // pred_region
        %s233 = ssub.s32 %s18, 1
        %s234 = sand.u32 %s31, 1
        %s235 = scalar_lea.sflag [#allocation3], %s234
        %s236 = sand.u32 %s31, 1
        %s237 = smul.addr %s236, 32
        %s238 = scalar_lea.vmem [#allocation2], %s237
        // Predicated region
        $region41: #{tpu_custom_call.1} parent=39 // pred_check
          %p239 = pneg %p44
        $region42: #{tpu_custom_call.1} parent=39 // pred_check_branch
          %241 = sbr.rel (%p239) target = $region44
        $region43: #{tpu_custom_call.1} parent=39 // pred_region
          %242 = dma.done %s235, 512
        $region44: #{tpu_custom_call.1} parent=39 // pred_fallthru
          _
        // Predicated region
        $region45: #{tpu_custom_call.1} parent=39 // pred_check
          %p243 = pneg %p65
        $region46: #{tpu_custom_call.1} parent=39 // pred_check_branch
          %245 = sbr.rel (%p243) target = $region48
        $region47: #{tpu_custom_call.1} parent=39 // pred_region
          %246 = dma.done [#allocation6], 2048
        $region48: #{tpu_custom_call.1} parent=39 // pred_fallthru
          _
        // Predicated region
        $region49: #{tpu_custom_call.1} parent=39 // pred_check
          %p247 = pneg %p107
        $region50: #{tpu_custom_call.1} parent=39 // pred_check_branch
          %249 = sbr.rel (%p247) target = $region52
        $region51: #{tpu_custom_call.1} parent=39 // pred_region
          %250 = dma.done [#allocation6], 1024
        $region52: #{tpu_custom_call.1} parent=39 // pred_fallthru
          _
        %s251 = sand.u32 %s31, 1
        %s252 = scalar_lea.sflag [#allocation3], %s251
        %s253 = sand.u32 %s31, 1
        %s254 = smul.addr %s253, 32
        %s255 = scalar_lea.vmem [#allocation2], %s254
        %p256 = pneg %p44
        %p257 = pneg %p41
        %p258 = pneg %p65
        %p259 = pneg %p62
        %p260 = pneg %p86
        %p261 = pneg %p83
        %p262 = pneg %p107
        %p263 = pneg %p104
        %p264 = pneg %p128
        %p265 = pneg %p125
        %p266 = pneg %p154
        %p267 = pneg %p151
        %s268 = sand.u32 %s141, 1
        %s269 = scalar_lea.sflag [#allocation4], %s268
        %s270 = sand.u32 %s141, 1
        %s271 = smul.addr %s270, 32
        %s272 = scalar_lea.vmem [#allocation8], %s271
        %s273 = smul.u32 4, %s23
        %s274 = smul.u32 4, %s23
        %v276 = vld [vmem:[%s238] sm:$0xff]
        %v277 = vld [vmem:[%s238 + $0x8] sm:$0xff]
        %v278 = vld [vmem:[%s238 + $0x10] sm:$0xff]
        %v279 = vld [vmem:[%s238 + $0x18] sm:$0xff]
        %v280 = vld [vmem:[#allocation5] sm:$0xf]
        %v281 = vld [vmem:[#allocation5 + $0x4] sm:$0xf]
        %v282 = vld [vmem:[#allocation5 + $0x8] sm:$0xf]
        %v283 = vld [vmem:[#allocation5 + $0xc] sm:$0xf]
        %v284 = vld [vmem:[#allocation5 + $0x10] sm:$0xf]
        %v285 = vld [vmem:[#allocation5 + $0x14] sm:$0xf]
        %v286 = vld [vmem:[#allocation5 + $0x18] sm:$0xf]
        %v287 = vld [vmem:[#allocation5 + $0x1c] sm:$0xf]
        %v288 = vld [vmem:[#allocation5 + $0x20] sm:$0xf]
        %v289 = vld [vmem:[#allocation5 + $0x24] sm:$0xf]
        %v290 = vld [vmem:[#allocation5 + $0x28] sm:$0xf]
        %v291 = vld [vmem:[#allocation5 + $0x2c] sm:$0xf]
        %v292 = vld [vmem:[#allocation5 + $0x30] sm:$0xf]
        %v293 = vld [vmem:[#allocation5 + $0x34] sm:$0xf]
        %v294 = vld [vmem:[#allocation5 + $0x38] sm:$0xf]
        %v295 = vld [vmem:[#allocation5 + $0x3c] sm:$0xf]
        %v296 = vld [vmem:[#allocation5 + $0x40] sm:$0xf]
        %v297 = vld [vmem:[#allocation5 + $0x44] sm:$0xf]
        %v298 = vld [vmem:[#allocation5 + $0x48] sm:$0xf]
        %v299 = vld [vmem:[#allocation5 + $0x4c] sm:$0xf]
        %v300 = vld [vmem:[#allocation5 + $0x50] sm:$0xf]
        %v301 = vld [vmem:[#allocation5 + $0x54] sm:$0xf]
        %v302 = vld [vmem:[#allocation5 + $0x58] sm:$0xf]
        %v303 = vld [vmem:[#allocation5 + $0x5c] sm:$0xf]
        %v304 = vld [vmem:[#allocation5 + $0x60] sm:$0xf]
        %v305 = vld [vmem:[#allocation5 + $0x64] sm:$0xf]
        %v306 = vld [vmem:[#allocation5 + $0x68] sm:$0xf]
        %v307 = vld [vmem:[#allocation5 + $0x6c] sm:$0xf]
        %v308 = vld [vmem:[#allocation5 + $0x70] sm:$0xf]
        %v309 = vld [vmem:[#allocation5 + $0x74] sm:$0xf]
        %v310 = vld [vmem:[#allocation5 + $0x78] sm:$0xf]
        %v311 = vld [vmem:[#allocation5 + $0x7c] sm:$0xf]
        %v312 = vld [vmem:[%s2] sm:$0x1]
        %v314 = vlaneseq
        %v315 = vshrl.u32 %v314, 7
        %v316 = vsub.s32 0, %v315
        %v317 = vrot.slane %v312, %v316
        %v323 = vunpack.c.l.b16 %v276
        %v324 = vunpack.c.h.b16 %v276
        %v325 = vunpack.c.l.b16 %v277
        %v326 = vunpack.c.h.b16 %v277
        %v327 = vunpack.c.l.b16 %v278
        %v328 = vunpack.c.h.b16 %v278
        %v329 = vunpack.c.l.b16 %v279
        %v330 = vunpack.c.h.b16 %v279
        %v331 = vpack.c.b16 %v325, %v323
        %v332 = vpack.c.b16 %v326, %v324
        %v333 = vpack.c.b16 %v329, %v327
        %v334 = vpack.c.b16 %v330, %v328
        %v371 = vunpack.c.l.b16 %v280
        %v372 = vunpack.c.l.b16 %v281
        %v373 = vunpack.c.l.b16 %v282
        %v374 = vunpack.c.l.b16 %v283
        %v375 = vunpack.c.l.b16 %v284
        %v376 = vunpack.c.l.b16 %v285
        %v377 = vunpack.c.l.b16 %v286
        %v378 = vunpack.c.l.b16 %v287
        %v379 = vunpack.c.l.b16 %v288
        %v380 = vunpack.c.l.b16 %v289
        %v381 = vunpack.c.l.b16 %v290
        %v382 = vunpack.c.l.b16 %v291
        %v383 = vunpack.c.l.b16 %v292
        %v384 = vunpack.c.l.b16 %v293
        %v385 = vunpack.c.l.b16 %v294
        %v386 = vunpack.c.l.b16 %v295
        %v387 = vunpack.c.l.b16 %v296
        %v388 = vunpack.c.l.b16 %v297
        %v389 = vunpack.c.l.b16 %v298
        %v390 = vunpack.c.l.b16 %v299
        %v391 = vunpack.c.l.b16 %v300
        %v392 = vunpack.c.l.b16 %v301
        %v393 = vunpack.c.l.b16 %v302
        %v394 = vunpack.c.l.b16 %v303
        %v395 = vunpack.c.l.b16 %v304
        %v396 = vunpack.c.l.b16 %v305
        %v397 = vunpack.c.l.b16 %v306
        %v398 = vunpack.c.l.b16 %v307
        %v399 = vunpack.c.l.b16 %v308
        %v400 = vunpack.c.l.b16 %v309
        %v401 = vunpack.c.l.b16 %v310
        %v402 = vunpack.c.l.b16 %v311
        %v403 = vpack.c.b16 %v372, %v371
        %v404 = vpack.c.b16 %v374, %v373
        %v405 = vpack.c.b16 %v376, %v375
        %v406 = vpack.c.b16 %v378, %v377
        %v407 = vpack.c.b16 %v380, %v379
        %v408 = vpack.c.b16 %v382, %v381
        %v409 = vpack.c.b16 %v384, %v383
        %v410 = vpack.c.b16 %v386, %v385
        %v411 = vpack.c.b16 %v388, %v387
        %v412 = vpack.c.b16 %v390, %v389
        %v413 = vpack.c.b16 %v392, %v391
        %v414 = vpack.c.b16 %v394, %v393
        %v415 = vpack.c.b16 %v396, %v395
        %v416 = vpack.c.b16 %v398, %v397
        %v417 = vpack.c.b16 %v400, %v399
        %v418 = vpack.c.b16 %v402, %v401
        %435 = vmatprep.subr.bf16.mxu0 0
        %436 = vmatpush1.bf16.msra.mxu0 %v410
        %437 = vmatprep.subr.bf16.mxu0 0
        %438 = vmatpush1.bf16.msra.mxu0 %v409
        %439 = vmatprep.subr.bf16.mxu0 0
        %440 = vmatpush1.bf16.msra.mxu0 %v408
        %441 = vmatprep.subr.bf16.mxu0 0
        %442 = vmatpush1.bf16.msra.mxu0 %v407
        %443 = vmatprep.subr.bf16.mxu0 0
        %444 = vmatpush1.bf16.msra.mxu0 %v406
        %445 = vmatprep.subr.bf16.mxu0 0
        %446 = vmatpush1.bf16.msra.mxu0 %v405
        %447 = vmatprep.subr.bf16.mxu0 0
        %448 = vmatpush1.bf16.msra.mxu0 %v404
        %449 = vmatprep.subr.bf16.mxu0 0
        %450 = vmatpush1.bf16.msra.mxu0 %v403
        %451 = vmatprep.subr.bf16.mxu0 0
        %452 = vmatpush2.bf16.msra.mxu0 %v418
        %453 = vmatprep.subr.bf16.mxu0 0
        %454 = vmatpush2.bf16.msra.mxu0 %v417
        %455 = vmatprep.subr.bf16.mxu0 0
        %456 = vmatpush2.bf16.msra.mxu0 %v416
        %457 = vmatprep.subr.bf16.mxu0 0
        %458 = vmatpush2.bf16.msra.mxu0 %v415
        %459 = vmatprep.subr.bf16.mxu0 0
        %460 = vmatpush2.bf16.msra.mxu0 %v414
        %461 = vmatprep.subr.bf16.mxu0 0
        %462 = vmatpush2.bf16.msra.mxu0 %v413
        %463 = vmatprep.subr.bf16.mxu0 0
        %464 = vmatpush2.bf16.msra.mxu0 %v412
        %465 = vmatprep.subr.bf16.mxu0 0
        %466 = vmatpush2.bf16.msra.mxu0 %v411
        %467 = vmatprep.mubr.bf16.mxu0 %v332
        %468 = vmatmul.mubr.bf16.gmra.mxu0 %v331
        %v469 = vpop.f32.mrf.mxu0
        %v470 = vadd.f32 %v317, %v469
        %v471 = vpop.f32.mrf.mxu0
        %v472 = vpop.f32.mrf.mxu0
        %v473 = vadd.f32 %v317, %v472
        %v474 = vpop.f32.mrf.mxu0
        %475 = vmatprep.mubr.bf16.mxu0 %v334
        %476 = vmatmul.mubr.bf16.gmra.mxu0 %v333
        %v477 = vpop.f32.mrf.mxu0
        %v478 = vadd.f32 %v317, %v477
        %v479 = vpop.f32.mrf.mxu0
        %v480 = vpop.f32.mrf.mxu0
        %v481 = vadd.f32 %v317, %v480
        %v482 = vpop.f32.mrf.mxu0
        %483 = vdwg.mxu0
        %v484 = vmax.f32 %v470, 0.0
        %v485 = vmax.f32 %v473, 0.0
        %v486 = vmax.f32 %v478, 0.0
        %v487 = vmax.f32 %v481, 0.0
        %v488 = vpack.c.bf16 %v485, %v484
        %v489 = vpack.c.bf16 %v487, %v486
        %v490 = vld [vmem:[#allocation7] sm:$0xf]
        %v491 = vld [vmem:[#allocation7 + $0x4] sm:$0xf]
        %v492 = vld [vmem:[#allocation7 + $0x8] sm:$0xf]
        %v493 = vld [vmem:[#allocation7 + $0xc] sm:$0xf]
        %v494 = vld [vmem:[#allocation7 + $0x10] sm:$0xf]
        %v495 = vld [vmem:[#allocation7 + $0x14] sm:$0xf]
        %v496 = vld [vmem:[#allocation7 + $0x18] sm:$0xf]
        %v497 = vld [vmem:[#allocation7 + $0x1c] sm:$0xf]
        %v498 = vld [vmem:[#allocation7 + $0x20] sm:$0xf]
        %v499 = vld [vmem:[#allocation7 + $0x24] sm:$0xf]
        %v500 = vld [vmem:[#allocation7 + $0x28] sm:$0xf]
        %v501 = vld [vmem:[#allocation7 + $0x2c] sm:$0xf]
        %v502 = vld [vmem:[#allocation7 + $0x30] sm:$0xf]
        %v503 = vld [vmem:[#allocation7 + $0x34] sm:$0xf]
        %v504 = vld [vmem:[#allocation7 + $0x38] sm:$0xf]
        %v505 = vld [vmem:[#allocation7 + $0x3c] sm:$0xf]
        %v506 = vld [vmem:[%s4] sm:$0x1]
        %v508 = vlaneseq
        %v509 = vshrl.u32 %v508, 7
        %v510 = vsub.s32 0, %v509
        %v511 = vrot.slane %v506, %v510
        %v529 = vunpack.c.l.b16 %v490
        %v530 = vunpack.c.l.b16 %v491
        %v531 = vunpack.c.l.b16 %v492
        %v532 = vunpack.c.l.b16 %v493
        %v533 = vunpack.c.l.b16 %v494
        %v534 = vunpack.c.l.b16 %v495
        %v535 = vunpack.c.l.b16 %v496
        %v536 = vunpack.c.l.b16 %v497
        %v537 = vunpack.c.l.b16 %v498
        %v538 = vunpack.c.l.b16 %v499
        %v539 = vunpack.c.l.b16 %v500
        %v540 = vunpack.c.l.b16 %v501
        %v541 = vunpack.c.l.b16 %v502
        %v542 = vunpack.c.l.b16 %v503
        %v543 = vunpack.c.l.b16 %v504
        %v544 = vunpack.c.l.b16 %v505
        %v545 = vpack.c.b16 %v530, %v529
        %v546 = vpack.c.b16 %v532, %v531
        %v547 = vpack.c.b16 %v534, %v533
        %v548 = vpack.c.b16 %v536, %v535
        %v549 = vpack.c.b16 %v538, %v537
        %v550 = vpack.c.b16 %v540, %v539
        %v551 = vpack.c.b16 %v542, %v541
        %v552 = vpack.c.b16 %v544, %v543
        %561 = vmatprep.subr.bf16.mxu0 0
        %562 = vmatpush1.bf16.msra.mxu0 %v552
        %563 = vmatprep.subr.bf16.mxu0 0
        %564 = vmatpush1.bf16.msra.mxu0 %v551
        %565 = vmatprep.subr.bf16.mxu0 0
        %566 = vmatpush1.bf16.msra.mxu0 %v550
        %567 = vmatprep.subr.bf16.mxu0 0
        %568 = vmatpush1.bf16.msra.mxu0 %v549
        %569 = vmatprep.subr.bf16.mxu0 0
        %570 = vmatpush1.bf16.msra.mxu0 %v548
        %571 = vmatprep.subr.bf16.mxu0 0
        %572 = vmatpush1.bf16.msra.mxu0 %v547
        %573 = vmatprep.subr.bf16.mxu0 0
        %574 = vmatpush1.bf16.msra.mxu0 %v546
        %575 = vmatprep.subr.bf16.mxu0 0
        %576 = vmatpush1.bf16.msra.mxu0 %v545
        %577 = vmatprep.subr.bf16.mxu0 0
        %578 = vmatpush2.bf16.msra.mxu0 0
        %579 = vmatprep.subr.bf16.mxu0 0
        %580 = vmatpush2.bf16.msra.mxu0 0
        %581 = vmatprep.subr.bf16.mxu0 0
        %582 = vmatpush2.bf16.msra.mxu0 0
        %583 = vmatprep.subr.bf16.mxu0 0
        %584 = vmatpush2.bf16.msra.mxu0 0
        %585 = vmatprep.subr.bf16.mxu0 0
        %586 = vmatpush2.bf16.msra.mxu0 0
        %587 = vmatprep.subr.bf16.mxu0 0
        %588 = vmatpush2.bf16.msra.mxu0 0
        %589 = vmatprep.subr.bf16.mxu0 0
        %590 = vmatpush2.bf16.msra.mxu0 0
        %591 = vmatprep.subr.bf16.mxu0 0
        %592 = vmatpush2.bf16.msra.mxu0 0
        %593 = vmatprep.mubr.bf16.mxu0 0
        %594 = vmatmul.mubr.bf16.gmra.mxu0 %v488
        %v595 = vpop.f32.mrf.mxu0
        %v596 = vadd.f32 %v511, %v595
        %v597 = vpop.f32.mrf.mxu0
        %v598 = vpop.f32.mrf.mxu0
        %v599 = vadd.f32 %v511, %v598
        %v600 = vpop.f32.mrf.mxu0
        %601 = vmatprep.mubr.bf16.mxu0 0
        %602 = vmatmul.mubr.bf16.gmra.mxu0 %v489
        %v603 = vpop.f32.mrf.mxu0
        %v604 = vadd.f32 %v511, %v603
        %v605 = vpop.f32.mrf.mxu0
        %v606 = vpop.f32.mrf.mxu0
        %v607 = vadd.f32 %v511, %v606
        %v608 = vpop.f32.mrf.mxu0
        %609 = vdwg.mxu0
        %v610 = vlaneseq
        %v611 = vand.u32 %v610, 127
        %vm612 = vcmp.lt.s32.totalorder %v611, 10
        %v613 = vsel %vm612, %v596, -1e+30
        %v614 = vsel %vm612, %v599, -1e+30
        %v615 = vsel %vm612, %v604, -1e+30
        %v616 = vsel %vm612, %v607, -1e+30
        %617 = vmax.xlane.f32.xlu0 %v613
        %v618 = vpop.xlane.xlu0 %617
        %619 = vmax.xlane.f32.xlu0 %v614
        %v620 = vpop.xlane.xlu0 %619
        %621 = vmax.xlane.f32.xlu0 %v615
        %v622 = vpop.xlane.xlu0 %621
        %623 = vmax.xlane.f32.xlu0 %v616
        %v624 = vpop.xlane.xlu0 %623
        %v625 = vsub.f32 %v613, %v618
        %v626 = vsub.f32 %v614, %v620
        %v627 = vsub.f32 %v615, %v622
        %v628 = vsub.f32 %v616, %v624
        %v629 = vmul.f32 %v625, 1.442695
        %v630 = vpow.pop %v629
        %v631 = vmul.f32 %v626, 1.442695
        %v632 = vpow.pop %v631
        %v633 = vmul.f32 %v627, 1.442695
        %v634 = vpow.pop %v633
        %v635 = vmul.f32 %v628, 1.442695
        %v636 = vpow.pop %v635
        %637 = vadd.xlane.f32.xlu0 %v630
        %v638 = vpop.xlane.xlu0 %637
        %639 = vadd.xlane.f32.xlu0 %v632
        %v640 = vpop.xlane.xlu0 %639
        %641 = vadd.xlane.f32.xlu0 %v634
        %v642 = vpop.xlane.xlu0 %641
        %643 = vadd.xlane.f32.xlu0 %v636
        %v644 = vpop.xlane.xlu0 %643
        %v645 = vrcp.pop %v638
        %v646 = vrcp.pop %v640
        %v647 = vrcp.pop %v642
        %v648 = vrcp.pop %v644
        %v649 = vmul.f32 %v630, %v645
        %v650 = vmul.f32 %v632, %v646
        %v651 = vmul.f32 %v634, %v647
        %v652 = vmul.f32 %v636, %v648
        %653 = vst [vmem:[%s272] sm:$0xff] %v649
        %654 = vst [vmem:[%s272 + $0x8] sm:$0xff] %v650
        %655 = vst [vmem:[%s272 + $0x10] sm:$0xff] %v651
        %656 = vst [vmem:[%s272 + $0x18] sm:$0xff] %v652
        %s657 = sand.u32 %s141, 1
        %s658 = scalar_lea.sflag [#allocation4], %s657
        %s659 = sand.u32 %s141, 1
        %s660 = smul.addr %s659, 32
        %s661 = scalar_lea.vmem [#allocation8], %s660
        // Predicated region
        $region53: #{tpu_custom_call.1} parent=39 // pred_check
          %p662 = pneg %p151
        $region54: #{tpu_custom_call.1} parent=39 // pred_check_branch
          %664 = sbr.rel (%p662) target = $region56
        $region55: #{tpu_custom_call.1} parent=39 // pred_region
          %s665 = smul.u32 4, %s23
          %s667 = ssub.s32 512, 512
          %668 = vsyncadd %s658, %s667
          %s669 = smul.addr %s665, 128
          %s670 = scalar_lea.hbm %s5, %s669
          %s671 = sshll.u32 %s661, 4
          %s672 = int_to_ptr.vmem [resolvable:$true] %s671
          %677 = dma.vmem_to_hbm [thread:$0]  %s672, 512, %s670, %s658, 128, 128, 8
        $region56: #{tpu_custom_call.1} parent=39 // pred_fallthru
          _
      $region40: #{tpu_custom_call.1} parent=5 // pred_fallthru
        _
      %p678 = scmp.le.s32.totalorder 2, %s18
      // Predicated region
      $region57: #{tpu_custom_call.1} parent=5 // pred_check
        %p679 = pneg %p678
      $region58: #{tpu_custom_call.1} parent=5 // pred_check_branch
        %681 = sbr.rel (%p679) target = $region60
      $region59: #{tpu_custom_call.1} parent=5 // pred_region
        %s682 = ssub.s32 %s18, 2
        // Predicated region
        $region61: #{tpu_custom_call.1} parent=59 // pred_check
          %p683 = pneg %p157
        $region62: #{tpu_custom_call.1} parent=59 // pred_check_branch
          %685 = sbr.rel (%p683) target = $region64
        $region63: #{tpu_custom_call.1} parent=59 // pred_region
          %s686 = sand.u32 %s142, 1
          %s687 = scalar_lea.sflag [#allocation4], %s686
          %s688 = sand.u32 %s142, 1
          %s689 = smul.addr %s688, 32
          %s690 = scalar_lea.vmem [#allocation8], %s689
          %691 = dma.done %s687, 512
        $region64: #{tpu_custom_call.1} parent=59 // pred_fallthru
          _
      $region60: #{tpu_custom_call.1} parent=5 // pred_fallthru
        _
    $region6: #{tpu_custom_call.1} parent=1 // loop_footer
      %s22 = sadd.s32 1, %s18
    $region7: #{tpu_custom_call.1} parent=1 // loop_footer_branch
      %17 = sbr.rel target = $region3
    $region8: #{tpu_custom_call.1} parent=1 // loop_exit
      _
    %692 = vsyncpa [#allocation3], 1
    %s693 = scalar_lea.sflag [#allocation3], 1
    %694 = vsyncpa %s693, 1
    %695 = vsyncpa [#allocation6], 1
    %696 = vsyncpa [#allocation4], 1
    %s697 = scalar_lea.sflag [#allocation4], 1
    %698 = vsyncpa %s697, 1

</llo_original>
